<compile_context>
chip_gen: v6e
topology: v6e:2x2x1
jax: 0.10.0
libtpu: 0.0.40
codegen_flags: <defaults>
</compile_context>

<pallas_src>
import jax
import jax.numpy as jnp
import numpy as np
from jax.experimental import pallas as pl
from jax.experimental.pallas import tpu as pltpu

# ---- configuration: BasicConv(in_planes=4, out_planes=8, kernel_size=3, padding=1) ----
B = 2
C_IN = 4
C_OUT = 8
KH = KW = 3
STRIDE = 1
PAD = 1
H = 16
W = 16
OH = (H + 2 * PAD - KH) // STRIDE + 1      # 16
OW = (W + 2 * PAD - KW) // STRIDE + 1      # 16
N = B * OH * OW                            # 512  (lane axis, multiple of 128)
CK = C_IN * KH * KW                        # 36   (contraction dim)
EPS = 1e-5


# ---------------- Pallas kernel ----------------

def _conv_bn_relu_kernel(xcol_ref, w_ref, gb_ref, o_ref):
    # xcol: (CK, N) bf16 im2col patches | w: (C_OUT, CK) bf16
    # gb:   (C_OUT, 2) f32, column 0 = gamma, column 1 = beta
    # out:  (C_OUT, N) f32, lane-dense
    y = jnp.dot(w_ref[...], xcol_ref[...],
                preferred_element_type=jnp.float32)              # bf16 MXU matmul, f32 acc

    inv_n = 1.0 / float(N)
    s1 = jnp.sum(y, axis=1, keepdims=True)                       # Σ y      (independent
    s2 = jnp.sum(y * y, axis=1, keepdims=True)                   # Σ y²      XLU reductions)
    mean = s1 * inv_n
    var = s2 * inv_n - mean * mean                               # biased variance (train BN)

    gb = gb_ref[...]
    gamma = gb[:, 0:1]
    beta = gb[:, 1:2]
    scale = jax.lax.rsqrt(var + EPS) * gamma                     # fold gamma into scale (EUP)
    shift = beta - mean * scale                                  # fold mean into the bias
    o_ref[...] = jnp.maximum(y * scale + shift, 0.0)             # one VPU pass + ReLU, dense vst


def conv_bn_relu(xcol, w2d, gb):
    # Single-block call: whole arrays in VMEM, no grid, no pipelining overhead.
    return pl.pallas_call(
        _conv_bn_relu_kernel,
        out_shape=jax.ShapeDtypeStruct((C_OUT, N), jnp.float32),
        in_specs=[
            pl.BlockSpec(memory_space=pltpu.MemorySpace.VMEM),   # xcol (CK, N) bf16
            pl.BlockSpec(memory_space=pltpu.MemorySpace.VMEM),   # w2d  (C_OUT, CK) bf16
            pl.BlockSpec(memory_space=pltpu.MemorySpace.VMEM),   # gb   (C_OUT, 2) f32
        ],
        out_specs=pl.BlockSpec(memory_space=pltpu.MemorySpace.VMEM),
        cost_estimate=pl.CostEstimate(
            flops=2 * C_OUT * CK * N + 8 * C_OUT * N,
            transcendentals=C_OUT,
            bytes_accessed=2 * (CK * N + C_OUT * CK) + 4 * (2 * C_OUT + C_OUT * N)),
    )(xcol, w2d, gb)


# ---------------- forward pass (wrapper) ----------------

def basic_conv_forward(x, w, gamma, beta):
    """x: (B, C_IN, H, W) NCHW; w: (C_OUT, C_IN, KH, KW); gamma/beta: (C_OUT,)."""
    # im2col glue on the SMALL padded tensor only: pad -> tiny transpose -> 9 static taps.
    # Rows ordered (cin, kh, kw) to match w.reshape(C_OUT, -1); columns ordered (b, oy, ox)
    # so the lane axis is the dense flattened batch*spatial dim.
    xp = jnp.pad(x, ((0, 0), (0, 0), (PAD, PAD), (PAD, PAD))).astype(jnp.bfloat16)
    xp = xp.transpose(1, 0, 2, 3)                                 # (C_IN, B, Hp, Wp), ~5 KiB
    taps = [xp[:, :, i:i + OH, j:j + OW] for i in range(KH) for j in range(KW)]
    xcol = jnp.stack(taps, axis=1).reshape(CK, N)                 # (36, 512) bf16, lane-dense

    w2d = w.reshape(C_OUT, CK).astype(jnp.bfloat16)
    gb = jnp.stack([gamma, beta], axis=1)                         # (C_OUT, 2) f32

    out = conv_bn_relu(xcol, w2d, gb)                             # (C_OUT, B*OH*OW) f32

    # single layout change back to NCHW at the true module boundary
    return out.reshape(C_OUT, B, OH, OW).transpose(1, 0, 2, 3)


# ---------------- pure-JAX reference (for verification) ----------------

def basic_conv_reference(x, w, gamma, beta):
    y = jax.lax.conv_general_dilated(
        x, w, window_strides=(STRIDE, STRIDE),
        padding=((PAD, PAD), (PAD, PAD)),
        dimension_numbers=("NCHW", "OIHW", "NCHW"))
    mean = jnp.mean(y, axis=(0, 2, 3), keepdims=True)
    var = jnp.mean((y - mean) ** 2, axis=(0, 2, 3), keepdims=True)
    yhat = (y - mean) * jax.lax.rsqrt(var + EPS)
    out = gamma[None, :, None, None] * yhat + beta[None, :, None, None]
    return jnp.maximum(out, 0.0)


# ---------------- main ----------------

if __name__ == "__main__":
    key = jax.random.PRNGKey(0)
    kx, kw, kg, kb = jax.random.split(key, 4)
    x = jax.random.normal(kx, (B, C_IN, H, W), dtype=jnp.float32)
    w = 0.2 * jax.random.normal(kw, (C_OUT, C_IN, KH, KW), dtype=jnp.float32)
    gamma = 1.0 + 0.1 * jax.random.normal(kg, (C_OUT,), dtype=jnp.float32)
    beta = 0.1 * jax.random.normal(kb, (C_OUT,), dtype=jnp.float32)

    out = jax.block_until_ready(basic_conv_forward(x, w, gamma, beta))
    ref = jax.block_until_ready(basic_conv_reference(x, w, gamma, beta))
    assert out.shape == (B, C_OUT, OH, OW)
    # bf16 matmul operands + f32 accumulation/BN: comfortably within this tolerance.
    np.testing.assert_allclose(np.asarray(out), np.asarray(ref), rtol=2e-2, atol=2e-2)
    print("KERNEL_OK")
</pallas_src>

<mosaic_0001>
module attributes {stable_mosaic.version = 11 : i64} {
  func.func @_conv_bn_relu_kernel(%arg0: memref<36x512xbf16, #tpu.memory_space<vmem>>, %arg1: memref<8x36xbf16, #tpu.memory_space<vmem>>, %arg2: memref<8x2xf32, #tpu.memory_space<vmem>>, %arg3: memref<8x512xf32, #tpu.memory_space<vmem>>) attributes {dimension_semantics = [], scalar_prefetch = 0 : i64, scratch_operands = 0 : i64, tpu.core_type = #tpu.core_type<tc>} {
    %c0 = arith.constant 0 : index
    %c0_0 = arith.constant 0 : index
    %0 = vector.load %arg1[%c0, %c0_0] : memref<8x36xbf16, #tpu.memory_space<vmem>>, vector<8x36xbf16>
    %c0_1 = arith.constant 0 : index
    %c0_2 = arith.constant 0 : index
    %1 = vector.load %arg0[%c0_1, %c0_2] : memref<36x512xbf16, #tpu.memory_space<vmem>>, vector<36x512xbf16>
    %cst = arith.constant dense<0.000000e+00> : vector<8x512xf32>
    %2 = tpu.matmul %0, %1, %cst {dimension_numbers = #tpu.dot_dimension_numbers<[1], [0], [0], [1], [0, 0, 1, 1], [], []>} : vector<8x36xbf16>, vector<36x512xbf16>, vector<8x512xf32> -> vector<8x512xf32>
    %cst_3 = arith.constant dense<0.000000e+00> : vector<8xf32>
    %3 = vector.multi_reduction <add>, %2, %cst_3 [1] : vector<8x512xf32> to vector<8xf32>
    %4 = vector.shape_cast %3 : vector<8xf32> to vector<8x1xf32>
    %5 = arith.mulf %2, %2 : vector<8x512xf32>
    %cst_4 = arith.constant dense<0.000000e+00> : vector<8xf32>
    %6 = vector.multi_reduction <add>, %5, %cst_4 [1] : vector<8x512xf32> to vector<8xf32>
    %7 = vector.shape_cast %6 : vector<8xf32> to vector<8x1xf32>
    %cst_5 = arith.constant 0.001953125 : f32
    %8 = vector.broadcast %cst_5 : f32 to vector<8x1xf32>
    %9 = arith.mulf %4, %8 : vector<8x1xf32>
    %cst_6 = arith.constant 0.001953125 : f32
    %10 = vector.broadcast %cst_6 : f32 to vector<8x1xf32>
    %11 = arith.mulf %7, %10 : vector<8x1xf32>
    %12 = arith.mulf %9, %9 : vector<8x1xf32>
    %13 = arith.subf %11, %12 : vector<8x1xf32>
    %c0_7 = arith.constant 0 : index
    %c0_8 = arith.constant 0 : index
    %14 = vector.load %arg2[%c0_7, %c0_8] : memref<8x2xf32, #tpu.memory_space<vmem>>, vector<8x2xf32>
    %15 = vector.extract_strided_slice %14 {offsets = [0, 0], sizes = [8, 1], strides = [1, 1]} : vector<8x2xf32> to vector<8x1xf32>
    %16 = vector.extract_strided_slice %14 {offsets = [0, 1], sizes = [8, 1], strides = [1, 1]} : vector<8x2xf32> to vector<8x1xf32>
    %cst_9 = arith.constant 9.99999974E-6 : f32
    %17 = vector.broadcast %cst_9 : f32 to vector<8x1xf32>
    %18 = arith.addf %13, %17 : vector<8x1xf32>
    %19 = math.rsqrt %18 : vector<8x1xf32>
    %20 = arith.mulf %19, %15 : vector<8x1xf32>
    %21 = arith.mulf %9, %20 : vector<8x1xf32>
    %22 = arith.subf %16, %21 : vector<8x1xf32>
    %23 = vector.broadcast %20 : vector<8x1xf32> to vector<8x512xf32>
    %24 = arith.mulf %2, %23 : vector<8x512xf32>
    %25 = vector.broadcast %22 : vector<8x1xf32> to vector<8x512xf32>
    %26 = arith.addf %24, %25 : vector<8x512xf32>
    %cst_10 = arith.constant 0.000000e+00 : f32
    %27 = vector.broadcast %cst_10 : f32 to vector<8x512xf32>
    %28 = arith.maximumf %26, %27 : vector<8x512xf32>
    %c0_11 = arith.constant 0 : index
    %c0_12 = arith.constant 0 : index
    %29 = vector.load %arg3[%c0_11, %c0_12] : memref<8x512xf32, #tpu.memory_space<vmem>>, vector<8x512xf32>
    tpu.vector_store %arg3[%c0_11, %c0_12], %28 {strides = array<i32>} : memref<8x512xf32, #tpu.memory_space<vmem>>, vector<8x512xf32>,
    return
  }
}

</mosaic_0001>

<llo_original>
// kernel: tpu_custom_call.1
$region0: #{tpu_custom_call.1}
  #allocation0 [shape = 'u32[]', space=smem, size = 0x4, offset = 0x4, fixed_abs, tag = 'smem constant byte address 0x4 - core index']
  #allocation1 [shape = 'u32[144,128]{1,0:T(1,128)}', space=vmem, size = 0x12000, scoped, tag = 'internal scratch']
  %s0 = inlined_call_operand.hbm [shape: bf16[36,512], index: 0, kind: input, shape index: {}]
  %s1 = inlined_call_operand.vmem [shape: bf16[8,36], index: 1, kind: input, shape index: {}]
  %s2 = inlined_call_operand.vmem [shape: f32[8,2], index: 2, kind: input, shape index: {}]
  %s3 = inlined_call_operand.hbm [shape: f32[8,512], index: 3, kind: output, shape index: {}]
  %s4 = sld [smem:[#allocation0]]
  $region26: #{tpu_custom_call.1} parent=0
    _
  %s6 = ssub.s32 1, %s4
  %s7 = scalar_select 0, %s6, %s4
  $region1: #{tpu_custom_call.1} parent=0
    #allocation2 [shape = 'u8[40960]{0}', space=vmem, size = 0xa000, scoped, tag = 'input window, operand 0, single buffered']
    #allocation3 [shape = 's32[1]{0}', space=sflag, size = 0x4, scoped, tag = 'scoped memory for tpu_custom_call.1']
    #allocation4 [shape = 's32[1]{0}', space=sflag, size = 0x4, scoped, tag = 'scoped memory for tpu_custom_call.1']
    #allocation5 [shape = 'u8[16384]{0}', space=vmem, size = 0x4000, scoped, tag = 'output window, operand 0, single buffered']
    %8 = vsyncpa [#allocation3], 0
    %9 = vsyncpa [#allocation4], 0
    // Predicated region
    $region2: #{tpu_custom_call.1} parent=1 // pred_check
      _
    $region3: #{tpu_custom_call.1} parent=1 // pred_check_branch
      %11 = sbr.rel (0) target = $region5
    $region4: #{tpu_custom_call.1} parent=1 // pred_region
      %s13 = ssub.s32 1280, 1280
      %14 = vsyncadd [#allocation3], %s13
      %s15 = sshll.u32 [#allocation2], 4
      %s16 = int_to_ptr.vmem [resolvable:$true] %s15
      %21 = dma.hbm_to_vmem [thread:$0]  %s0, 1280, %s16, [#allocation3], 256, 256, 16
    $region5: #{tpu_custom_call.1} parent=1 // pred_fallthru
      _
    // Predicated region
    $region6: #{tpu_custom_call.1} parent=1 // pred_check
      _
    $region7: #{tpu_custom_call.1} parent=1 // pred_check_branch
      %23 = sbr.rel (0) target = $region9
    $region8: #{tpu_custom_call.1} parent=1 // pred_region
      _
    $region9: #{tpu_custom_call.1} parent=1 // pred_fallthru
      _
    // Predicated region
    $region10: #{tpu_custom_call.1} parent=1 // pred_check
      _
    $region11: #{tpu_custom_call.1} parent=1 // pred_check_branch
      %25 = sbr.rel (0) target = $region13
    $region12: #{tpu_custom_call.1} parent=1 // pred_region
      _
    $region13: #{tpu_custom_call.1} parent=1 // pred_fallthru
      _
    // Predicated region
    $region14: #{tpu_custom_call.1} parent=1 // pred_check
      _
    $region15: #{tpu_custom_call.1} parent=1 // pred_check_branch
      %27 = sbr.rel (0) target = $region17
    $region16: #{tpu_custom_call.1} parent=1 // pred_region
      %28 = dma.done [#allocation3], 1280
    $region17: #{tpu_custom_call.1} parent=1 // pred_fallthru
      _
    %v30 = vld [vmem:[%s1] sm:$0xf]
    %v31 = vld [vmem:[#allocation2] sm:$0xff]
    %v32 = vld [vmem:[#allocation2 + $0x8] sm:$0xff]
    %v33 = vld [vmem:[#allocation2 + $0x10] sm:$0xff]
    %v34 = vld [vmem:[#allocation2 + $0x18] sm:$0xff]
    %v35 = vld [vmem:[#allocation2 + $0x20] sm:$0xff]
    %v36 = vld [vmem:[#allocation2 + $0x28] sm:$0xff]
    %v37 = vld [vmem:[#allocation2 + $0x30] sm:$0xff]
    %v38 = vld [vmem:[#allocation2 + $0x38] sm:$0xff]
    %v39 = vld [vmem:[#allocation2 + $0x40] sm:$0x33]
    %v40 = vld [vmem:[#allocation2 + $0x48] sm:$0x33]
    %v51 = vunpack.c.l.b16 %v31
    %v52 = vunpack.c.h.b16 %v31
    %v53 = vunpack.c.l.b16 %v32
    %v54 = vunpack.c.h.b16 %v32
    %v55 = vunpack.c.l.b16 %v33
    %v56 = vunpack.c.h.b16 %v33
    %v57 = vunpack.c.l.b16 %v34
    %v58 = vunpack.c.h.b16 %v34
    %v59 = vunpack.c.l.b16 %v35
    %v60 = vunpack.c.h.b16 %v35
    %v61 = vunpack.c.l.b16 %v36
    %v62 = vunpack.c.h.b16 %v36
    %v63 = vunpack.c.l.b16 %v37
    %v64 = vunpack.c.h.b16 %v37
    %v65 = vunpack.c.l.b16 %v38
    %v66 = vunpack.c.h.b16 %v38
    %v67 = vunpack.c.l.b16 %v39
    %v68 = vunpack.c.h.b16 %v39
    %v69 = vunpack.c.l.b16 %v40
    %v70 = vunpack.c.h.b16 %v40
    %v71 = vpack.c.b16 %v55, %v51
    %v72 = vpack.c.b16 %v56, %v52
    %v73 = vpack.c.b16 %v57, %v53
    %v74 = vpack.c.b16 %v58, %v54
    %v75 = vpack.c.b16 %v63, %v59
    %v76 = vpack.c.b16 %v64, %v60
    %v77 = vpack.c.b16 %v65, %v61
    %v78 = vpack.c.b16 %v66, %v62
    %v79 = vpack.c.b16 %v67, %v67
    %v80 = vpack.c.b16 %v68, %v68
    %v81 = vpack.c.b16 %v69, %v69
    %v82 = vpack.c.b16 %v70, %v70
    %vm91 = vcmask 293888
    %v93 = vsel %vm91, %v30, 0
    %vm95 = vcmask 1041408
    %v97 = vsel %vm95, %v79, 0
    %v100 = vsel %vm95, %v80, 0
    %v103 = vsel %vm95, %v81, 0
    %v106 = vsel %vm95, %v82, 0
    %108 = vmatprep.subr.bf16.mxu0 0
    %109 = vmatpush1.bf16.msra.mxu0 0
    %110 = vmatprep.subr.bf16.mxu0 0
    %111 = vmatpush1.bf16.msra.mxu0 0
    %112 = vmatprep.subr.bf16.mxu0 0
    %113 = vmatpush1.bf16.msra.mxu0 0
    %114 = vmatprep.subr.bf16.mxu0 0
    %115 = vmatpush1.bf16.msra.mxu0 0
    %116 = vmatprep.subr.bf16.mxu0 0
    %117 = vmatpush1.bf16.msra.mxu0 0
    %118 = vmatprep.subr.bf16.mxu0 %v100
    %119 = vmatpush1.bf16.msra.mxu0 %v97
    %120 = vmatprep.subr.bf16.mxu0 %v76
    %121 = vmatpush1.bf16.msra.mxu0 %v75
    %122 = vmatprep.subr.bf16.mxu0 %v72
    %123 = vmatpush1.bf16.msra.mxu0 %v71
    %124 = vmatprep.subr.bf16.mxu0 0
    %125 = vmatpush2.bf16.msra.mxu0 0
    %126 = vmatprep.subr.bf16.mxu0 0
    %127 = vmatpush2.bf16.msra.mxu0 0
    %128 = vmatprep.subr.bf16.mxu0 0
    %129 = vmatpush2.bf16.msra.mxu0 0
    %130 = vmatprep.subr.bf16.mxu0 0
    %131 = vmatpush2.bf16.msra.mxu0 0
    %132 = vmatprep.subr.bf16.mxu0 0
    %133 = vmatpush2.bf16.msra.mxu0 0
    %134 = vmatprep.subr.bf16.mxu0 0
    %135 = vmatpush2.bf16.msra.mxu0 0
    %136 = vmatprep.subr.bf16.mxu0 0
    %137 = vmatpush2.bf16.msra.mxu0 0
    %138 = vmatprep.subr.bf16.mxu0 0
    %139 = vmatpush2.bf16.msra.mxu0 0
    %140 = vmatprep.mubr.bf16.mxu0 0
    %141 = vmatmul.mubr.bf16.gmra.mxu0 %v93
    %v142 = vpop.f32.mrf.mxu0
    %v143 = vadd.f32 0.0, %v142
    %v144 = vpop.f32.mrf.mxu0
    %v145 = vadd.f32 0.0, %v144
    %v146 = vpop.f32.mrf.mxu0
    %v147 = vpop.f32.mrf.mxu0
    %148 = vdwg.mxu0
    %149 = vmatprep.subr.bf16.mxu0 0
    %150 = vmatpush1.bf16.msra.mxu0 0
    %151 = vmatprep.subr.bf16.mxu0 0
    %152 = vmatpush1.bf16.msra.mxu0 0
    %153 = vmatprep.subr.bf16.mxu0 0
    %154 = vmatpush1.bf16.msra.mxu0 0
    %155 = vmatprep.subr.bf16.mxu0 0
    %156 = vmatpush1.bf16.msra.mxu0 0
    %157 = vmatprep.subr.bf16.mxu0 0
    %158 = vmatpush1.bf16.msra.mxu0 0
    %159 = vmatprep.subr.bf16.mxu0 %v106
    %160 = vmatpush1.bf16.msra.mxu0 %v103
    %161 = vmatprep.subr.bf16.mxu0 %v78
    %162 = vmatpush1.bf16.msra.mxu0 %v77
    %163 = vmatprep.subr.bf16.mxu0 %v74
    %164 = vmatpush1.bf16.msra.mxu0 %v73
    %165 = vmatprep.subr.bf16.mxu0 0
    %166 = vmatpush2.bf16.msra.mxu0 0
    %167 = vmatprep.subr.bf16.mxu0 0
    %168 = vmatpush2.bf16.msra.mxu0 0
    %169 = vmatprep.subr.bf16.mxu0 0
    %170 = vmatpush2.bf16.msra.mxu0 0
    %171 = vmatprep.subr.bf16.mxu0 0
    %172 = vmatpush2.bf16.msra.mxu0 0
    %173 = vmatprep.subr.bf16.mxu0 0
    %174 = vmatpush2.bf16.msra.mxu0 0
    %175 = vmatprep.subr.bf16.mxu0 0
    %176 = vmatpush2.bf16.msra.mxu0 0
    %177 = vmatprep.subr.bf16.mxu0 0
    %178 = vmatpush2.bf16.msra.mxu0 0
    %179 = vmatprep.subr.bf16.mxu0 0
    %180 = vmatpush2.bf16.msra.mxu0 0
    %181 = vmatprep.mubr.bf16.mxu0 0
    %182 = vmatmul.mubr.bf16.gmra.mxu0 %v93
    %v183 = vpop.f32.mrf.mxu0
    %v184 = vadd.f32 0.0, %v183
    %v185 = vpop.f32.mrf.mxu0
    %v186 = vadd.f32 0.0, %v185
    %v187 = vpop.f32.mrf.mxu0
    %v188 = vpop.f32.mrf.mxu0
    %189 = vdwg.mxu0
    %v190 = vadd.f32 %v143, %v145
    %v191 = vadd.f32 %v190, %v184
    %v192 = vadd.f32 %v191, %v186
    %193 = vadd.xlane.f32.xlu0 %v192
    %v194 = vpop.xlane.xlu0 %193
    %v195 = vmul.f32 %v143, %v143
    %v196 = vmul.f32 %v145, %v145
    %v197 = vmul.f32 %v184, %v184
    %v198 = vmul.f32 %v186, %v186
    %v199 = vadd.f32 %v195, %v196
    %v200 = vadd.f32 %v199, %v197
    %v201 = vadd.f32 %v200, %v198
    %202 = vadd.xlane.f32.xlu0 %v201
    %v203 = vpop.xlane.xlu0 %202
    %v204 = vmul.f32 %v194, 0.001953125
    %v205 = vmul.f32 %v203, 0.001953125
    %v206 = vmul.f32 %v204, %v204
    %v207 = vsub.f32 %v205, %v206
    %v208 = vld [vmem:[%s2] sm:$0xff]
    %v209 = vadd.f32 %v207, 1e-05
    %v210 = vrsqrt.pop %v209
    %v211 = vmul.f32 %v210, %v208
    %v212 = vmul.f32 %v204, %v211
    %214 = vrot.lane.b32.xlu0 %v212, 1
    %v215 = vpop.permute.xlu0 %214
    %v217 = vsub.f32 %v208, %v215
    %219 = vset.pattern.permute.xlu0 0
    %220 = vperm.xlu0 %219, %v211
    %v221 = vpop.permute.xlu0 %220
    %v223 = vmul.f32 %v143, %v221
    %v224 = vmul.f32 %v145, %v221
    %v225 = vmul.f32 %v184, %v221
    %v226 = vmul.f32 %v186, %v221
    %228 = vset.pattern.permute.xlu0 1
    %229 = vperm.xlu0 %228, %v217
    %v230 = vpop.permute.xlu0 %229
    %v232 = vadd.f32 %v223, %v230
    %v233 = vadd.f32 %v224, %v230
    %v234 = vadd.f32 %v225, %v230
    %v235 = vadd.f32 %v226, %v230
    %v236 = vmax.f32 %v232, 0.0
    %v237 = vmax.f32 %v233, 0.0
    %v238 = vmax.f32 %v234, 0.0
    %v239 = vmax.f32 %v235, 0.0
    %240 = vst [vmem:[#allocation5] sm:$0xff] %v236
    %241 = vst [vmem:[#allocation5 + $0x8] sm:$0xff] %v237
    %242 = vst [vmem:[#allocation5 + $0x10] sm:$0xff] %v238
    %243 = vst [vmem:[#allocation5 + $0x18] sm:$0xff] %v239
    // Predicated region
    $region18: #{tpu_custom_call.1} parent=1 // pred_check
      _
    $region19: #{tpu_custom_call.1} parent=1 // pred_check_branch
      %245 = sbr.rel (0) target = $region21
    $region20: #{tpu_custom_call.1} parent=1 // pred_region
      %s247 = ssub.s32 512, 512
      %248 = vsyncadd [#allocation4], %s247
      %s250 = sshll.u32 [#allocation5], 4
      %s251 = int_to_ptr.vmem [resolvable:$true] %s250
      %253 = dma.vmem_to_hbm [thread:$0]  %s251, 512, %s3, [#allocation4]
    $region21: #{tpu_custom_call.1} parent=1 // pred_fallthru
      _
    // Predicated region
    $region22: #{tpu_custom_call.1} parent=1 // pred_check
      _
    $region23: #{tpu_custom_call.1} parent=1 // pred_check_branch
      %255 = sbr.rel (0) target = $region25
    $region24: #{tpu_custom_call.1} parent=1 // pred_region
      %256 = dma.done [#allocation4], 512
    $region25: #{tpu_custom_call.1} parent=1 // pred_fallthru
      _
    %257 = vsyncpa [#allocation3], 1
    %258 = vsyncpa [#allocation4], 1

</llo_original>
